<compile_context>
chip_gen: v5e
topology: v5e:2x2
jax: 0.10.0
libtpu: 0.0.40
codegen_flags: <defaults>
</compile_context>

<pallas_src>
import math

import jax
import jax.numpy as jnp
from jax.experimental import pallas as pl
from jax.experimental.pallas import tpu as pltpu


def _round_up(n, m):
    return (n + m - 1) // m * m


def classifier_kernel(x_ref, w1_ref, b1_ref, w2_ref, b2_ref, o_ref):
    # hidden = relu(x @ W1 + b1)  -- bf16 MXU matmul, f32 accumulation
    h = jnp.dot(x_ref[...], w1_ref[...], preferred_element_type=jnp.float32)
    h = jnp.maximum(h + b1_ref[...], jnp.float32(0.0))       # (TB, H) + (1, H)

    # logits = hidden @ W2 + b2   -- cast h back to bf16 for the MXU
    logits = jnp.dot(h.astype(jnp.bfloat16), w2_ref[...],
                     preferred_element_type=jnp.float32)
    logits = logits + b2_ref[...]                             # (TB, Y) + (1, Y)

    # numerically-stable softmax over the class dim (block width == y_dim, so
    # no padded lanes participate in the max/sum)
    m = jnp.max(logits, axis=-1, keepdims=True)
    e = jnp.exp(logits - m)
    denom = jnp.sum(e, axis=-1, keepdims=True)
    o_ref[...] = (e * pl.reciprocal(denom, approx=False)).astype(o_ref.dtype)


def classifier_forward(x, w1, b1, w2, b2):
    """x: (B, x_dim) f32; returns (B, y_dim) f32 softmax probabilities."""
    B, x_dim = x.shape
    h_dim = w1.shape[1]
    y_dim = w2.shape[1]

    # --- host-side prep: lane-align the contraction dim, pick a batch tile ---
    x_pad_dim = _round_up(x_dim, 128)                 # 784 -> 896
    tile_b = 256 if B >= 256 else _round_up(B, 16)    # sublane-friendly tile
    b_pad = _round_up(B, tile_b)

    x_p = jnp.zeros((b_pad, x_pad_dim), jnp.bfloat16)
    x_p = x_p.at[:B, :x_dim].set(x.astype(jnp.bfloat16))

    w1_p = jnp.zeros((x_pad_dim, h_dim), jnp.bfloat16)
    w1_p = w1_p.at[:x_dim, :].set(w1.astype(jnp.bfloat16))
    w2_bf = w2.astype(jnp.bfloat16)

    b1_r = b1.reshape(1, h_dim).astype(jnp.float32)
    b2_r = b2.reshape(1, y_dim).astype(jnp.float32)

    grid = (b_pad // tile_b,)

    cost = pl.CostEstimate(
        flops=2 * b_pad * (x_pad_dim * h_dim + h_dim * y_dim),
        transcendentals=b_pad * y_dim,
        bytes_accessed=(x_p.size * 2 + w1_p.size * 2 + w2_bf.size * 2
                        + (h_dim + y_dim) * 4 + b_pad * y_dim * 4),
    )

    out = pl.pallas_call(
        classifier_kernel,
        out_shape=jax.ShapeDtypeStruct((b_pad, y_dim), jnp.float32),
        grid_spec=pltpu.PrefetchScalarGridSpec(
            num_scalar_prefetch=0,
            grid=grid,
            in_specs=[
                pl.BlockSpec((tile_b, x_pad_dim), lambda i: (i, 0)),   # x tile
                pl.BlockSpec((x_pad_dim, h_dim), lambda i: (0, 0)),    # W1 (resident)
                pl.BlockSpec((1, h_dim), lambda i: (0, 0)),            # b1
                pl.BlockSpec((h_dim, y_dim), lambda i: (0, 0)),        # W2
                pl.BlockSpec((1, y_dim), lambda i: (0, 0)),            # b2
            ],
            out_specs=pl.BlockSpec((tile_b, y_dim), lambda i: (i, 0)),
        ),
        compiler_params=pltpu.CompilerParams(
            dimension_semantics=("parallel",),
        ),
        cost_estimate=cost,
    )(x_p, w1_p, b1_r, w2_bf, b2_r)

    return out[:B]


def init_linear(key, in_features, out_features):
    """PyTorch-style nn.Linear init: U(-1/sqrt(fan_in), +1/sqrt(fan_in)).

    Returns W with shape (in_features, out_features) (transposed for x @ W).
    """
    kw, kb = jax.random.split(key)
    bound = 1.0 / math.sqrt(in_features)
    w = jax.random.uniform(kw, (in_features, out_features), jnp.float32, -bound, bound)
    b = jax.random.uniform(kb, (out_features,), jnp.float32, -bound, bound)
    return w, b


if __name__ == "__main__":
    # Classifier(dims=[x_dim, h_dim, y_dim]); MNIST-like sizes, small batch.
    x_dim, h_dim, y_dim = 784, 256, 10
    batch = 8

    root = jax.random.PRNGKey(0)
    k_x, k_l1, k_l2 = jax.random.split(root, 3)

    x = jax.random.normal(k_x, (batch, x_dim), jnp.float32)
    w1, b1 = init_linear(k_l1, x_dim, h_dim)
    w2, b2 = init_linear(k_l2, h_dim, y_dim)

    probs = classifier_forward(x, w1, b1, w2, b2)
    probs = jax.block_until_ready(probs)

    # Reference with the same bf16 quantization of matmul inputs (f32 accumulate).
    xb = x.astype(jnp.bfloat16).astype(jnp.float32)
    w1b = w1.astype(jnp.bfloat16).astype(jnp.float32)
    w2b = w2.astype(jnp.bfloat16).astype(jnp.float32)
    h_ref = jnp.maximum(xb @ w1b + b1, 0.0)
    h_ref = h_ref.astype(jnp.bfloat16).astype(jnp.float32)
    ref = jax.nn.softmax(h_ref @ w2b + b2, axis=-1)

    # Pure-f32 reference for a coarse sanity check of the bf16 path.
    ref_f32 = jax.nn.softmax(jnp.maximum(x @ w1 + b1, 0.0) @ w2 + b2, axis=-1)

    assert probs.shape == (batch, y_dim)
    assert jnp.allclose(probs, ref, atol=2e-3, rtol=2e-3)
    assert jnp.allclose(probs, ref_f32, atol=2e-2, rtol=2e-2)
    assert jnp.allclose(jnp.sum(probs, axis=-1), 1.0, atol=1e-5)

    print("KERNEL_OK")
</pallas_src>

<mosaic_0001>
module attributes {stable_mosaic.version = 11 : i64} {
  func.func @classifier_kernel(%arg0: i32, %arg1: memref<16x896xbf16, #tpu.memory_space<vmem>>, %arg2: memref<896x256xbf16, #tpu.memory_space<vmem>>, %arg3: memref<1x256xf32, #tpu.memory_space<vmem>>, %arg4: memref<256x10xbf16, #tpu.memory_space<vmem>>, %arg5: memref<1x10xf32, #tpu.memory_space<vmem>>, %arg6: memref<16x10xf32, #tpu.memory_space<vmem>>) attributes {dimension_semantics = [#tpu.dimension_semantics<parallel>], iteration_bounds = array<i64: 1>, scalar_prefetch = 0 : i64, scratch_operands = 0 : i64, tpu.core_type = #tpu.core_type<tc>, window_params = [{transform_indices = @transform_0, window_bounds = array<i64: 16, 896>}, {pipeline_mode = #tpu.pipeline_mode<synchronous>, transform_indices = @transform_1, window_bounds = array<i64: 896, 256>}, {pipeline_mode = #tpu.pipeline_mode<synchronous>, transform_indices = @transform_2, window_bounds = array<i64: 1, 256>}, {pipeline_mode = #tpu.pipeline_mode<synchronous>, transform_indices = @transform_3, window_bounds = array<i64: 256, 10>}, {pipeline_mode = #tpu.pipeline_mode<synchronous>, transform_indices = @transform_4, window_bounds = array<i64: 1, 10>}, {transform_indices = @transform_5, window_bounds = array<i64: 16, 10>}]} {
    %c0 = arith.constant 0 : index
    %c0_0 = arith.constant 0 : index
    %0 = vector.load %arg1[%c0, %c0_0] : memref<16x896xbf16, #tpu.memory_space<vmem>>, vector<16x896xbf16>
    %c0_1 = arith.constant 0 : index
    %c0_2 = arith.constant 0 : index
    %1 = vector.load %arg2[%c0_1, %c0_2] : memref<896x256xbf16, #tpu.memory_space<vmem>>, vector<896x256xbf16>
    %cst = arith.constant dense<0.000000e+00> : vector<16x256xf32>
    %2 = tpu.matmul %0, %1, %cst {dimension_numbers = #tpu.dot_dimension_numbers<[1], [0], [0], [1], [0, 0, 1, 1], [], []>} : vector<16x896xbf16>, vector<896x256xbf16>, vector<16x256xf32> -> vector<16x256xf32>
    %c0_3 = arith.constant 0 : index
    %c0_4 = arith.constant 0 : index
    %3 = vector.load %arg3[%c0_3, %c0_4] : memref<1x256xf32, #tpu.memory_space<vmem>>, vector<1x256xf32>
    %4 = vector.broadcast %3 : vector<1x256xf32> to vector<16x256xf32>
    %5 = arith.addf %2, %4 : vector<16x256xf32>
    %cst_5 = arith.constant 0.000000e+00 : f32
    %6 = vector.broadcast %cst_5 : f32 to vector<16x256xf32>
    %7 = arith.maximumf %5, %6 : vector<16x256xf32>
    %8 = arith.truncf %7 : vector<16x256xf32> to vector<16x256xbf16>
    %c0_6 = arith.constant 0 : index
    %c0_7 = arith.constant 0 : index
    %9 = vector.load %arg4[%c0_6, %c0_7] : memref<256x10xbf16, #tpu.memory_space<vmem>>, vector<256x10xbf16>
    %cst_8 = arith.constant dense<0.000000e+00> : vector<16x10xf32>
    %10 = tpu.matmul %8, %9, %cst_8 {dimension_numbers = #tpu.dot_dimension_numbers<[1], [0], [0], [1], [0, 0, 1, 1], [], []>} : vector<16x256xbf16>, vector<256x10xbf16>, vector<16x10xf32> -> vector<16x10xf32>
    %c0_9 = arith.constant 0 : index
    %c0_10 = arith.constant 0 : index
    %11 = vector.load %arg5[%c0_9, %c0_10] : memref<1x10xf32, #tpu.memory_space<vmem>>, vector<1x10xf32>
    %12 = vector.broadcast %11 : vector<1x10xf32> to vector<16x10xf32>
    %13 = arith.addf %10, %12 : vector<16x10xf32>
    %cst_11 = arith.constant dense<0xFF800000> : vector<16xf32>
    %14 = vector.multi_reduction <maximumf>, %13, %cst_11 [1] : vector<16x10xf32> to vector<16xf32>
    %15 = vector.shape_cast %14 : vector<16xf32> to vector<16x1xf32>
    %16 = vector.broadcast %15 : vector<16x1xf32> to vector<16x10xf32>
    %17 = arith.subf %13, %16 : vector<16x10xf32>
    %18 = math.exp %17 : vector<16x10xf32>
    %cst_12 = arith.constant dense<0.000000e+00> : vector<16xf32>
    %19 = vector.multi_reduction <add>, %18, %cst_12 [1] : vector<16x10xf32> to vector<16xf32>
    %20 = vector.shape_cast %19 : vector<16xf32> to vector<16x1xf32>
    %21 = tpu.reciprocal %20 : vector<16x1xf32> -> vector<16x1xf32>
    %22 = vector.broadcast %21 : vector<16x1xf32> to vector<16x10xf32>
    %23 = arith.mulf %18, %22 : vector<16x10xf32>
    %c0_13 = arith.constant 0 : index
    %c0_14 = arith.constant 0 : index
    %24 = vector.load %arg6[%c0_13, %c0_14] : memref<16x10xf32, #tpu.memory_space<vmem>>, vector<16x10xf32>
    tpu.vector_store %arg6[%c0_13, %c0_14], %23 {strides = array<i32>} : memref<16x10xf32, #tpu.memory_space<vmem>>, vector<16x10xf32>,
    return
  }
  func.func @transform_0(%arg0: i32) -> (i32, i32) {
    %c0_i32 = arith.constant 0 : i32
    %c0_i32_0 = arith.constant 0 : i32
    return %arg0, %c0_i32 : i32, i32
  }
  func.func @transform_1(%arg0: i32) -> (i32, i32) {
    %c0_i32 = arith.constant 0 : i32
    %c0_i32_0 = arith.constant 0 : i32
    %c0_i32_1 = arith.constant 0 : i32
    return %c0_i32, %c0_i32_0 : i32, i32
  }
  func.func @transform_2(%arg0: i32) -> (i32, i32) {
    %c0_i32 = arith.constant 0 : i32
    %c0_i32_0 = arith.constant 0 : i32
    %c0_i32_1 = arith.constant 0 : i32
    return %c0_i32, %c0_i32_0 : i32, i32
  }
  func.func @transform_3(%arg0: i32) -> (i32, i32) {
    %c0_i32 = arith.constant 0 : i32
    %c0_i32_0 = arith.constant 0 : i32
    %c0_i32_1 = arith.constant 0 : i32
    return %c0_i32, %c0_i32_0 : i32, i32
  }
  func.func @transform_4(%arg0: i32) -> (i32, i32) {
    %c0_i32 = arith.constant 0 : i32
    %c0_i32_0 = arith.constant 0 : i32
    %c0_i32_1 = arith.constant 0 : i32
    return %c0_i32, %c0_i32_0 : i32, i32
  }
  func.func @transform_5(%arg0: i32) -> (i32, i32) {
    %c0_i32 = arith.constant 0 : i32
    %c0_i32_0 = arith.constant 0 : i32
    return %arg0, %c0_i32 : i32, i32
  }
}

</mosaic_0001>

<llo_original>
// kernel: tpu_custom_call.1
$region0: #{tpu_custom_call.1}
  #allocation0 [shape = 'u32[]', space=smem, size = 0x4, offset = 0x4, fixed_abs, tag = 'smem constant byte address 0x4 - core index']
  #allocation1 [shape = 'u32[72,128]{1,0:T(1,128)}', space=vmem, size = 0x9000, scoped, tag = 'internal scratch']
  %s0 = inlined_call_operand.vmem [shape: bf16[16,896], index: 0, kind: input, shape index: {}]
  %s1 = inlined_call_operand.hbm [shape: bf16[896,256], index: 1, kind: input, shape index: {}]
  %s2 = inlined_call_operand.vmem [shape: f32[1,256], index: 2, kind: input, shape index: {}]
  %s3 = inlined_call_operand.vmem [shape: bf16[256,10], index: 3, kind: input, shape index: {}]
  %s4 = inlined_call_operand.vmem [shape: f32[1,10], index: 4, kind: input, shape index: {}]
  %s5 = inlined_call_operand.hbm [shape: f32[16,10], index: 5, kind: output, shape index: {}]
  %s6 = sld [smem:[#allocation0]]
  $region34: #{tpu_custom_call.1} parent=0
    _
  %s8 = ssub.s32 1, %s6
  %s9 = scalar_select 0, %s8, %s6
  $region1: #{tpu_custom_call.1} parent=0
    #allocation2 [shape = 'u8[458752]{0}', space=vmem, size = 0x70000, scoped, tag = 'input window, operand 1, single buffered']
    #allocation3 [shape = 's32[1]{0}', space=sflag, size = 0x4, scoped, tag = 'scoped memory for tpu_custom_call.1']
    #allocation4 [shape = 's32[1]{0}', space=sflag, size = 0x4, scoped, tag = 'scoped memory for tpu_custom_call.1']
    #allocation5 [shape = 'u8[8192]{0}', space=vmem, size = 0x2000, scoped, tag = 'output window, operand 0, single buffered']
    %10 = vsyncpa [#allocation3], 0
    %11 = vsyncpa [#allocation4], 0
    // Predicated region
    $region2: #{tpu_custom_call.1} parent=1 // pred_check
      _
    $region3: #{tpu_custom_call.1} parent=1 // pred_check_branch
      %13 = sbr.rel (0) target = $region5
    $region4: #{tpu_custom_call.1} parent=1 // pred_region
      _
    $region5: #{tpu_custom_call.1} parent=1 // pred_fallthru
      _
    // Predicated region
    $region6: #{tpu_custom_call.1} parent=1 // pred_check
      _
    $region7: #{tpu_custom_call.1} parent=1 // pred_check_branch
      %15 = sbr.rel (0) target = $region9
    $region8: #{tpu_custom_call.1} parent=1 // pred_region
      %17 = vsyncadd [#allocation3], 0
      %s18 = sshll.u32 %s1, 4
      %s19 = int_to_ptr.hbm [resolvable:$true] %s18
      %s20 = sshll.u32 [#allocation2], 4
      %s21 = int_to_ptr.vmem [resolvable:$true] %s20
      %26 = dma.hbm_to_vmem [thread:$0]  %s19, 14336, %s21, [#allocation3], 128, 128, 8
    $region9: #{tpu_custom_call.1} parent=1 // pred_fallthru
      _
    // Predicated region
    $region10: #{tpu_custom_call.1} parent=1 // pred_check
      _
    $region11: #{tpu_custom_call.1} parent=1 // pred_check_branch
      %28 = sbr.rel (0) target = $region13
    $region12: #{tpu_custom_call.1} parent=1 // pred_region
      _
    $region13: #{tpu_custom_call.1} parent=1 // pred_fallthru
      _
    // Predicated region
    $region14: #{tpu_custom_call.1} parent=1 // pred_check
      _
    $region15: #{tpu_custom_call.1} parent=1 // pred_check_branch
      %30 = sbr.rel (0) target = $region17
    $region16: #{tpu_custom_call.1} parent=1 // pred_region
      _
    $region17: #{tpu_custom_call.1} parent=1 // pred_fallthru
      _
    // Predicated region
    $region18: #{tpu_custom_call.1} parent=1 // pred_check
      _
    $region19: #{tpu_custom_call.1} parent=1 // pred_check_branch
      %32 = sbr.rel (0) target = $region21
    $region20: #{tpu_custom_call.1} parent=1 // pred_region
      _
    $region21: #{tpu_custom_call.1} parent=1 // pred_fallthru
      _
    // Predicated region
    $region22: #{tpu_custom_call.1} parent=1 // pred_check
      _
    $region23: #{tpu_custom_call.1} parent=1 // pred_check_branch
      %34 = sbr.rel (0) target = $region25
    $region24: #{tpu_custom_call.1} parent=1 // pred_region
      %36 = dma.done [#allocation3], 14336
    $region25: #{tpu_custom_call.1} parent=1 // pred_fallthru
      _
    %v37 = vld [vmem:[%s0] sm:$0xff]
    %v38 = vld [vmem:[%s0 + $0x8] sm:$0xff]
    %v39 = vld [vmem:[%s0 + $0x10] sm:$0xff]
    %v40 = vld [vmem:[%s0 + $0x18] sm:$0xf]
    %v41 = vld [vmem:[%s0 + $0x1c] sm:$0xff]
    %v42 = vld [vmem:[%s0 + $0x24] sm:$0xff]
    %v43 = vld [vmem:[%s0 + $0x2c] sm:$0xff]
    %v44 = vld [vmem:[%s0 + $0x34] sm:$0xf]
    %v45 = vld [vmem:[#allocation2] sm:$0xff]
    %v46 = vld [vmem:[#allocation2 + $0x8] sm:$0xff]
    %v47 = vld [vmem:[#allocation2 + $0x10] sm:$0xff]
    %v48 = vld [vmem:[#allocation2 + $0x18] sm:$0xff]
    %v49 = vld [vmem:[#allocation2 + $0x20] sm:$0xff]
    %v50 = vld [vmem:[#allocation2 + $0x28] sm:$0xff]
    %v51 = vld [vmem:[#allocation2 + $0x30] sm:$0xff]
    %v52 = vld [vmem:[#allocation2 + $0x38] sm:$0xff]
    %v53 = vld [vmem:[#allocation2 + $0x40] sm:$0xff]
    %v54 = vld [vmem:[#allocation2 + $0x48] sm:$0xff]
    %v55 = vld [vmem:[#allocation2 + $0x50] sm:$0xff]
    %v56 = vld [vmem:[#allocation2 + $0x58] sm:$0xff]
    %v57 = vld [vmem:[#allocation2 + $0x60] sm:$0xff]
    %v58 = vld [vmem:[#allocation2 + $0x68] sm:$0xff]
    %v59 = vld [vmem:[#allocation2 + $0x70] sm:$0xff]
    %v60 = vld [vmem:[#allocation2 + $0x78] sm:$0xff]
    %v61 = vld [vmem:[#allocation2 + $0x80] sm:$0xff]
    %v62 = vld [vmem:[#allocation2 + $0x88] sm:$0xff]
    %v63 = vld [vmem:[#allocation2 + $0x90] sm:$0xff]
    %v64 = vld [vmem:[#allocation2 + $0x98] sm:$0xff]
    %v65 = vld [vmem:[#allocation2 + $0xa0] sm:$0xff]
    %v66 = vld [vmem:[#allocation2 + $0xa8] sm:$0xff]
    %v67 = vld [vmem:[#allocation2 + $0xb0] sm:$0xff]
    %v68 = vld [vmem:[#allocation2 + $0xb8] sm:$0xff]
    %v69 = vld [vmem:[#allocation2 + $0xc0] sm:$0xff]
    %v70 = vld [vmem:[#allocation2 + $0xc8] sm:$0xff]
    %v71 = vld [vmem:[#allocation2 + $0xd0] sm:$0xff]
    %v72 = vld [vmem:[#allocation2 + $0xd8] sm:$0xff]
    %v73 = vld [vmem:[#allocation2 + $0xe0] sm:$0xff]
    %v74 = vld [vmem:[#allocation2 + $0xe8] sm:$0xff]
    %v75 = vld [vmem:[#allocation2 + $0xf0] sm:$0xff]
    %v76 = vld [vmem:[#allocation2 + $0xf8] sm:$0xff]
    %v77 = vld [vmem:[#allocation2 + $0x100] sm:$0xff]
    %v78 = vld [vmem:[#allocation2 + $0x108] sm:$0xff]
    %v79 = vld [vmem:[#allocation2 + $0x110] sm:$0xff]
    %v80 = vld [vmem:[#allocation2 + $0x118] sm:$0xff]
    %v81 = vld [vmem:[#allocation2 + $0x120] sm:$0xff]
    %v82 = vld [vmem:[#allocation2 + $0x128] sm:$0xff]
    %v83 = vld [vmem:[#allocation2 + $0x130] sm:$0xff]
    %v84 = vld [vmem:[#allocation2 + $0x138] sm:$0xff]
    %v85 = vld [vmem:[#allocation2 + $0x140] sm:$0xff]
    %v86 = vld [vmem:[#allocation2 + $0x148] sm:$0xff]
    %v87 = vld [vmem:[#allocation2 + $0x150] sm:$0xff]
    %v88 = vld [vmem:[#allocation2 + $0x158] sm:$0xff]
    %v89 = vld [vmem:[#allocation2 + $0x160] sm:$0xff]
    %v90 = vld [vmem:[#allocation2 + $0x168] sm:$0xff]
    %v91 = vld [vmem:[#allocation2 + $0x170] sm:$0xff]
    %v92 = vld [vmem:[#allocation2 + $0x178] sm:$0xff]
    %v93 = vld [vmem:[#allocation2 + $0x180] sm:$0xff]
    %v94 = vld [vmem:[#allocation2 + $0x188] sm:$0xff]
    %v95 = vld [vmem:[#allocation2 + $0x190] sm:$0xff]
    %v96 = vld [vmem:[#allocation2 + $0x198] sm:$0xff]
    %v97 = vld [vmem:[#allocation2 + $0x1a0] sm:$0xff]
    %v98 = vld [vmem:[#allocation2 + $0x1a8] sm:$0xff]
    %v99 = vld [vmem:[#allocation2 + $0x1b0] sm:$0xff]
    %v100 = vld [vmem:[#allocation2 + $0x1b8] sm:$0xff]
    %v101 = vld [vmem:[#allocation2 + $0x1c0] sm:$0xff]
    %v102 = vld [vmem:[#allocation2 + $0x1c8] sm:$0xff]
    %v103 = vld [vmem:[#allocation2 + $0x1d0] sm:$0xff]
    %v104 = vld [vmem:[#allocation2 + $0x1d8] sm:$0xff]
    %v105 = vld [vmem:[#allocation2 + $0x1e0] sm:$0xff]
    %v106 = vld [vmem:[#allocation2 + $0x1e8] sm:$0xff]
    %v107 = vld [vmem:[#allocation2 + $0x1f0] sm:$0xff]
    %v108 = vld [vmem:[#allocation2 + $0x1f8] sm:$0xff]
    %v109 = vld [vmem:[#allocation2 + $0x200] sm:$0xff]
    %v110 = vld [vmem:[#allocation2 + $0x208] sm:$0xff]
    %v111 = vld [vmem:[#allocation2 + $0x210] sm:$0xff]
    %v112 = vld [vmem:[#allocation2 + $0x218] sm:$0xff]
    %v113 = vld [vmem:[#allocation2 + $0x220] sm:$0xff]
    %v114 = vld [vmem:[#allocation2 + $0x228] sm:$0xff]
    %v115 = vld [vmem:[#allocation2 + $0x230] sm:$0xff]
    %v116 = vld [vmem:[#allocation2 + $0x238] sm:$0xff]
    %v117 = vld [vmem:[#allocation2 + $0x240] sm:$0xff]
    %v118 = vld [vmem:[#allocation2 + $0x248] sm:$0xff]
    %v119 = vld [vmem:[#allocation2 + $0x250] sm:$0xff]
    %v120 = vld [vmem:[#allocation2 + $0x258] sm:$0xff]
    %v121 = vld [vmem:[#allocation2 + $0x260] sm:$0xff]
    %v122 = vld [vmem:[#allocation2 + $0x268] sm:$0xff]
    %v123 = vld [vmem:[#allocation2 + $0x270] sm:$0xff]
    %v124 = vld [vmem:[#allocation2 + $0x278] sm:$0xff]
    %v125 = vld [vmem:[#allocation2 + $0x280] sm:$0xff]
    %v126 = vld [vmem:[#allocation2 + $0x288] sm:$0xff]
    %v127 = vld [vmem:[#allocation2 + $0x290] sm:$0xff]
    %v128 = vld [vmem:[#allocation2 + $0x298] sm:$0xff]
    %v129 = vld [vmem:[#allocation2 + $0x2a0] sm:$0xff]
    %v130 = vld [vmem:[#allocation2 + $0x2a8] sm:$0xff]
    %v131 = vld [vmem:[#allocation2 + $0x2b0] sm:$0xff]
    %v132 = vld [vmem:[#allocation2 + $0x2b8] sm:$0xff]
    %v133 = vld [vmem:[#allocation2 + $0x2c0] sm:$0xff]
    %v134 = vld [vmem:[#allocation2 + $0x2c8] sm:$0xff]
    %v135 = vld [vmem:[#allocation2 + $0x2d0] sm:$0xff]
    %v136 = vld [vmem:[#allocation2 + $0x2d8] sm:$0xff]
    %v137 = vld [vmem:[#allocation2 + $0x2e0] sm:$0xff]
    %v138 = vld [vmem:[#allocation2 + $0x2e8] sm:$0xff]
    %v139 = vld [vmem:[#allocation2 + $0x2f0] sm:$0xff]
    %v140 = vld [vmem:[#allocation2 + $0x2f8] sm:$0xff]
    %v141 = vld [vmem:[#allocation2 + $0x300] sm:$0xff]
    %v142 = vld [vmem:[#allocation2 + $0x308] sm:$0xff]
    %v143 = vld [vmem:[#allocation2 + $0x310] sm:$0xff]
    %v144 = vld [vmem:[#allocation2 + $0x318] sm:$0xff]
    %v145 = vld [vmem:[#allocation2 + $0x320] sm:$0xff]
    %v146 = vld [vmem:[#allocation2 + $0x328] sm:$0xff]
    %v147 = vld [vmem:[#allocation2 + $0x330] sm:$0xff]
    %v148 = vld [vmem:[#allocation2 + $0x338] sm:$0xff]
    %v149 = vld [vmem:[#allocation2 + $0x340] sm:$0xff]
    %v150 = vld [vmem:[#allocation2 + $0x348] sm:$0xff]
    %v151 = vld [vmem:[#allocation2 + $0x350] sm:$0xff]
    %v152 = vld [vmem:[#allocation2 + $0x358] sm:$0xff]
    %v153 = vld [vmem:[#allocation2 + $0x360] sm:$0xff]
    %v154 = vld [vmem:[#allocation2 + $0x368] sm:$0xff]
    %v155 = vld [vmem:[#allocation2 + $0x370] sm:$0xff]
    %v156 = vld [vmem:[#allocation2 + $0x378] sm:$0xff]
    %v157 = vld [vmem:[%s2] sm:$0x3]
    %v159 = vperm.slane %v157, 0
    %v160 = vperm.slane %v157, 1
    %v171 = vunpack.c.l.b16 %v37
    %v172 = vunpack.c.h.b16 %v37
    %v173 = vunpack.c.l.b16 %v38
    %v174 = vunpack.c.h.b16 %v38
    %v175 = vunpack.c.l.b16 %v39
    %v176 = vunpack.c.h.b16 %v39
    %v177 = vunpack.c.l.b16 %v40
    %v178 = vunpack.c.l.b16 %v41
    %v179 = vunpack.c.h.b16 %v41
    %v180 = vunpack.c.l.b16 %v42
    %v181 = vunpack.c.h.b16 %v42
    %v182 = vunpack.c.l.b16 %v43
    %v183 = vunpack.c.h.b16 %v43
    %v184 = vunpack.c.l.b16 %v44
    %v185 = vpack.c.b16 %v178, %v171
    %v186 = vpack.c.b16 %v179, %v172
    %v187 = vpack.c.b16 %v180, %v173
    %v188 = vpack.c.b16 %v181, %v174
    %v189 = vpack.c.b16 %v182, %v175
    %v190 = vpack.c.b16 %v183, %v176
    %v191 = vpack.c.b16 %v184, %v177
    %v311 = vunpack.c.l.b16 %v45
    %v312 = vunpack.c.h.b16 %v45
    %v313 = vunpack.c.l.b16 %v46
    %v314 = vunpack.c.h.b16 %v46
    %v315 = vunpack.c.l.b16 %v47
    %v316 = vunpack.c.h.b16 %v47
    %v317 = vunpack.c.l.b16 %v48
    %v318 = vunpack.c.h.b16 %v48
    %v319 = vunpack.c.l.b16 %v49
    %v320 = vunpack.c.h.b16 %v49
    %v321 = vunpack.c.l.b16 %v50
    %v322 = vunpack.c.h.b16 %v50
    %v323 = vunpack.c.l.b16 %v51
    %v324 = vunpack.c.h.b16 %v51
    %v325 = vunpack.c.l.b16 %v52
    %v326 = vunpack.c.h.b16 %v52
    %v327 = vunpack.c.l.b16 %v53
    %v328 = vunpack.c.h.b16 %v53
    %v329 = vunpack.c.l.b16 %v54
    %v330 = vunpack.c.h.b16 %v54
    %v331 = vunpack.c.l.b16 %v55
    %v332 = vunpack.c.h.b16 %v55
    %v333 = vunpack.c.l.b16 %v56
    %v334 = vunpack.c.h.b16 %v56
    %v335 = vunpack.c.l.b16 %v57
    %v336 = vunpack.c.h.b16 %v57
    %v337 = vunpack.c.l.b16 %v58
    %v338 = vunpack.c.h.b16 %v58
    %v339 = vunpack.c.l.b16 %v59
    %v340 = vunpack.c.h.b16 %v59
    %v341 = vunpack.c.l.b16 %v60
    %v342 = vunpack.c.h.b16 %v60
    %v343 = vunpack.c.l.b16 %v61
    %v344 = vunpack.c.h.b16 %v61
    %v345 = vunpack.c.l.b16 %v62
    %v346 = vunpack.c.h.b16 %v62
    %v347 = vunpack.c.l.b16 %v63
    %v348 = vunpack.c.h.b16 %v63
    %v349 = vunpack.c.l.b16 %v64
    %v350 = vunpack.c.h.b16 %v64
    %v351 = vunpack.c.l.b16 %v65
    %v352 = vunpack.c.h.b16 %v65
    %v353 = vunpack.c.l.b16 %v66
    %v354 = vunpack.c.h.b16 %v66
    %v355 = vunpack.c.l.b16 %v67
    %v356 = vunpack.c.h.b16 %v67
    %v357 = vunpack.c.l.b16 %v68
    %v358 = vunpack.c.h.b16 %v68
    %v359 = vunpack.c.l.b16 %v69
    %v360 = vunpack.c.h.b16 %v69
    %v361 = vunpack.c.l.b16 %v70
    %v362 = vunpack.c.h.b16 %v70
    %v363 = vunpack.c.l.b16 %v71
    %v364 = vunpack.c.h.b16 %v71
    %v365 = vunpack.c.l.b16 %v72
    %v366 = vunpack.c.h.b16 %v72
    %v367 = vunpack.c.l.b16 %v73
    %v368 = vunpack.c.h.b16 %v73
    %v369 = vunpack.c.l.b16 %v74
    %v370 = vunpack.c.h.b16 %v74
    %v371 = vunpack.c.l.b16 %v75
    %v372 = vunpack.c.h.b16 %v75
    %v373 = vunpack.c.l.b16 %v76
    %v374 = vunpack.c.h.b16 %v76
    %v375 = vunpack.c.l.b16 %v77
    %v376 = vunpack.c.h.b16 %v77
    %v377 = vunpack.c.l.b16 %v78
    %v378 = vunpack.c.h.b16 %v78
    %v379 = vunpack.c.l.b16 %v79
    %v380 = vunpack.c.h.b16 %v79
    %v381 = vunpack.c.l.b16 %v80
    %v382 = vunpack.c.h.b16 %v80
    %v383 = vunpack.c.l.b16 %v81
    %v384 = vunpack.c.h.b16 %v81
    %v385 = vunpack.c.l.b16 %v82
    %v386 = vunpack.c.h.b16 %v82
    %v387 = vunpack.c.l.b16 %v83
    %v388 = vunpack.c.h.b16 %v83
    %v389 = vunpack.c.l.b16 %v84
    %v390 = vunpack.c.h.b16 %v84
    %v391 = vunpack.c.l.b16 %v85
    %v392 = vunpack.c.h.b16 %v85
    %v393 = vunpack.c.l.b16 %v86
    %v394 = vunpack.c.h.b16 %v86
    %v395 = vunpack.c.l.b16 %v87
    %v396 = vunpack.c.h.b16 %v87
    %v397 = vunpack.c.l.b16 %v88
    %v398 = vunpack.c.h.b16 %v88
    %v399 = vunpack.c.l.b16 %v89
    %v400 = vunpack.c.h.b16 %v89
    %v401 = vunpack.c.l.b16 %v90
    %v402 = vunpack.c.h.b16 %v90
    %v403 = vunpack.c.l.b16 %v91
    %v404 = vunpack.c.h.b16 %v91
    %v405 = vunpack.c.l.b16 %v92
    %v406 = vunpack.c.h.b16 %v92
    %v407 = vunpack.c.l.b16 %v93
    %v408 = vunpack.c.h.b16 %v93
    %v409 = vunpack.c.l.b16 %v94
    %v410 = vunpack.c.h.b16 %v94
    %v411 = vunpack.c.l.b16 %v95
    %v412 = vunpack.c.h.b16 %v95
    %v413 = vunpack.c.l.b16 %v96
    %v414 = vunpack.c.h.b16 %v96
    %v415 = vunpack.c.l.b16 %v97
    %v416 = vunpack.c.h.b16 %v97
    %v417 = vunpack.c.l.b16 %v98
    %v418 = vunpack.c.h.b16 %v98
    %v419 = vunpack.c.l.b16 %v99
    %v420 = vunpack.c.h.b16 %v99
    %v421 = vunpack.c.l.b16 %v100
    %v422 = vunpack.c.h.b16 %v100
    %v423 = vunpack.c.l.b16 %v101
    %v424 = vunpack.c.h.b16 %v101
    %v425 = vunpack.c.l.b16 %v102
    %v426 = vunpack.c.h.b16 %v102
    %v427 = vunpack.c.l.b16 %v103
    %v428 = vunpack.c.h.b16 %v103
    %v429 = vunpack.c.l.b16 %v104
    %v430 = vunpack.c.h.b16 %v104
    %v431 = vunpack.c.l.b16 %v105
    %v432 = vunpack.c.h.b16 %v105
    %v433 = vunpack.c.l.b16 %v106
    %v434 = vunpack.c.h.b16 %v106
    %v435 = vunpack.c.l.b16 %v107
    %v436 = vunpack.c.h.b16 %v107
    %v437 = vunpack.c.l.b16 %v108
    %v438 = vunpack.c.h.b16 %v108
    %v439 = vunpack.c.l.b16 %v109
    %v440 = vunpack.c.h.b16 %v109
    %v441 = vunpack.c.l.b16 %v110
    %v442 = vunpack.c.h.b16 %v110
    %v443 = vunpack.c.l.b16 %v111
    %v444 = vunpack.c.h.b16 %v111
    %v445 = vunpack.c.l.b16 %v112
    %v446 = vunpack.c.h.b16 %v112
    %v447 = vunpack.c.l.b16 %v113
    %v448 = vunpack.c.h.b16 %v113
    %v449 = vunpack.c.l.b16 %v114
    %v450 = vunpack.c.h.b16 %v114
    %v451 = vunpack.c.l.b16 %v115
    %v452 = vunpack.c.h.b16 %v115
    %v453 = vunpack.c.l.b16 %v116
    %v454 = vunpack.c.h.b16 %v116
    %v455 = vunpack.c.l.b16 %v117
    %v456 = vunpack.c.h.b16 %v117
    %v457 = vunpack.c.l.b16 %v118
    %v458 = vunpack.c.h.b16 %v118
    %v459 = vunpack.c.l.b16 %v119
    %v460 = vunpack.c.h.b16 %v119
    %v461 = vunpack.c.l.b16 %v120
    %v462 = vunpack.c.h.b16 %v120
    %v463 = vunpack.c.l.b16 %v121
    %v464 = vunpack.c.h.b16 %v121
    %v465 = vunpack.c.l.b16 %v122
    %v466 = vunpack.c.h.b16 %v122
    %v467 = vunpack.c.l.b16 %v123
    %v468 = vunpack.c.h.b16 %v123
    %v469 = vunpack.c.l.b16 %v124
    %v470 = vunpack.c.h.b16 %v124
    %v471 = vunpack.c.l.b16 %v125
    %v472 = vunpack.c.h.b16 %v125
    %v473 = vunpack.c.l.b16 %v126
    %v474 = vunpack.c.h.b16 %v126
    %v475 = vunpack.c.l.b16 %v127
    %v476 = vunpack.c.h.b16 %v127
    %v477 = vunpack.c.l.b16 %v128
    %v478 = vunpack.c.h.b16 %v128
    %v479 = vunpack.c.l.b16 %v129
    %v480 = vunpack.c.h.b16 %v129
    %v481 = vunpack.c.l.b16 %v130
    %v482 = vunpack.c.h.b16 %v130
    %v483 = vunpack.c.l.b16 %v131
    %v484 = vunpack.c.h.b16 %v131
    %v485 = vunpack.c.l.b16 %v132
    %v486 = vunpack.c.h.b16 %v132
    %v487 = vunpack.c.l.b16 %v133
    %v488 = vunpack.c.h.b16 %v133
    %v489 = vunpack.c.l.b16 %v134
    %v490 = vunpack.c.h.b16 %v134
    %v491 = vunpack.c.l.b16 %v135
    %v492 = vunpack.c.h.b16 %v135
    %v493 = vunpack.c.l.b16 %v136
    %v494 = vunpack.c.h.b16 %v136
    %v495 = vunpack.c.l.b16 %v137
    %v496 = vunpack.c.h.b16 %v137
    %v497 = vunpack.c.l.b16 %v138
    %v498 = vunpack.c.h.b16 %v138
    %v499 = vunpack.c.l.b16 %v139
    %v500 = vunpack.c.h.b16 %v139
    %v501 = vunpack.c.l.b16 %v140
    %v502 = vunpack.c.h.b16 %v140
    %v503 = vunpack.c.l.b16 %v141
    %v504 = vunpack.c.h.b16 %v141
    %v505 = vunpack.c.l.b16 %v142
    %v506 = vunpack.c.h.b16 %v142
    %v507 = vunpack.c.l.b16 %v143
    %v508 = vunpack.c.h.b16 %v143
    %v509 = vunpack.c.l.b16 %v144
    %v510 = vunpack.c.h.b16 %v144
    %v511 = vunpack.c.l.b16 %v145
    %v512 = vunpack.c.h.b16 %v145
    %v513 = vunpack.c.l.b16 %v146
    %v514 = vunpack.c.h.b16 %v146
    %v515 = vunpack.c.l.b16 %v147
    %v516 = vunpack.c.h.b16 %v147
    %v517 = vunpack.c.l.b16 %v148
    %v518 = vunpack.c.h.b16 %v148
    %v519 = vunpack.c.l.b16 %v149
    %v520 = vunpack.c.h.b16 %v149
    %v521 = vunpack.c.l.b16 %v150
    %v522 = vunpack.c.h.b16 %v150
    %v523 = vunpack.c.l.b16 %v151
    %v524 = vunpack.c.h.b16 %v151
    %v525 = vunpack.c.l.b16 %v152
    %v526 = vunpack.c.h.b16 %v152
    %v527 = vunpack.c.l.b16 %v153
    %v528 = vunpack.c.h.b16 %v153
    %v529 = vunpack.c.l.b16 %v154
    %v530 = vunpack.c.h.b16 %v154
    %v531 = vunpack.c.l.b16 %v155
    %v532 = vunpack.c.h.b16 %v155
    %v533 = vunpack.c.l.b16 %v156
    %v534 = vunpack.c.h.b16 %v156
    %v535 = vpack.c.b16 %v313, %v311
    %v536 = vpack.c.b16 %v314, %v312
    %v537 = vpack.c.b16 %v317, %v315
    %v538 = vpack.c.b16 %v318, %v316
    %v539 = vpack.c.b16 %v321, %v319
    %v540 = vpack.c.b16 %v322, %v320
    %v541 = vpack.c.b16 %v325, %v323
    %v542 = vpack.c.b16 %v326, %v324
    %v543 = vpack.c.b16 %v329, %v327
    %v544 = vpack.c.b16 %v330, %v328
    %v545 = vpack.c.b16 %v333, %v331
    %v546 = vpack.c.b16 %v334, %v332
    %v547 = vpack.c.b16 %v337, %v335
    %v548 = vpack.c.b16 %v338, %v336
    %v549 = vpack.c.b16 %v341, %v339
    %v550 = vpack.c.b16 %v342, %v340
    %v551 = vpack.c.b16 %v345, %v343
    %v552 = vpack.c.b16 %v346, %v344
    %v553 = vpack.c.b16 %v349, %v347
    %v554 = vpack.c.b16 %v350, %v348
    %v555 = vpack.c.b16 %v353, %v351
    %v556 = vpack.c.b16 %v354, %v352
    %v557 = vpack.c.b16 %v357, %v355
    %v558 = vpack.c.b16 %v358, %v356
    %v559 = vpack.c.b16 %v361, %v359
    %v560 = vpack.c.b16 %v362, %v360
    %v561 = vpack.c.b16 %v365, %v363
    %v562 = vpack.c.b16 %v366, %v364
    %v563 = vpack.c.b16 %v369, %v367
    %v564 = vpack.c.b16 %v370, %v368
    %v565 = vpack.c.b16 %v373, %v371
    %v566 = vpack.c.b16 %v374, %v372
    %v567 = vpack.c.b16 %v377, %v375
    %v568 = vpack.c.b16 %v378, %v376
    %v569 = vpack.c.b16 %v381, %v379
    %v570 = vpack.c.b16 %v382, %v380
    %v571 = vpack.c.b16 %v385, %v383
    %v572 = vpack.c.b16 %v386, %v384
    %v573 = vpack.c.b16 %v389, %v387
    %v574 = vpack.c.b16 %v390, %v388
    %v575 = vpack.c.b16 %v393, %v391
    %v576 = vpack.c.b16 %v394, %v392
    %v577 = vpack.c.b16 %v397, %v395
    %v578 = vpack.c.b16 %v398, %v396
    %v579 = vpack.c.b16 %v401, %v399
    %v580 = vpack.c.b16 %v402, %v400
    %v581 = vpack.c.b16 %v405, %v403
    %v582 = vpack.c.b16 %v406, %v404
    %v583 = vpack.c.b16 %v409, %v407
    %v584 = vpack.c.b16 %v410, %v408
    %v585 = vpack.c.b16 %v413, %v411
    %v586 = vpack.c.b16 %v414, %v412
    %v587 = vpack.c.b16 %v417, %v415
    %v588 = vpack.c.b16 %v418, %v416
    %v589 = vpack.c.b16 %v421, %v419
    %v590 = vpack.c.b16 %v422, %v420
    %v591 = vpack.c.b16 %v425, %v423
    %v592 = vpack.c.b16 %v426, %v424
    %v593 = vpack.c.b16 %v429, %v427
    %v594 = vpack.c.b16 %v430, %v428
    %v595 = vpack.c.b16 %v433, %v431
    %v596 = vpack.c.b16 %v434, %v432
    %v597 = vpack.c.b16 %v437, %v435
    %v598 = vpack.c.b16 %v438, %v436
    %v599 = vpack.c.b16 %v441, %v439
    %v600 = vpack.c.b16 %v442, %v440
    %v601 = vpack.c.b16 %v445, %v443
    %v602 = vpack.c.b16 %v446, %v444
    %v603 = vpack.c.b16 %v449, %v447
    %v604 = vpack.c.b16 %v450, %v448
    %v605 = vpack.c.b16 %v453, %v451
    %v606 = vpack.c.b16 %v454, %v452
    %v607 = vpack.c.b16 %v457, %v455
    %v608 = vpack.c.b16 %v458, %v456
    %v609 = vpack.c.b16 %v461, %v459
    %v610 = vpack.c.b16 %v462, %v460
    %v611 = vpack.c.b16 %v465, %v463
    %v612 = vpack.c.b16 %v466, %v464
    %v613 = vpack.c.b16 %v469, %v467
    %v614 = vpack.c.b16 %v470, %v468
    %v615 = vpack.c.b16 %v473, %v471
    %v616 = vpack.c.b16 %v474, %v472
    %v617 = vpack.c.b16 %v477, %v475
    %v618 = vpack.c.b16 %v478, %v476
    %v619 = vpack.c.b16 %v481, %v479
    %v620 = vpack.c.b16 %v482, %v480
    %v621 = vpack.c.b16 %v485, %v483
    %v622 = vpack.c.b16 %v486, %v484
    %v623 = vpack.c.b16 %v489, %v487
    %v624 = vpack.c.b16 %v490, %v488
    %v625 = vpack.c.b16 %v493, %v491
    %v626 = vpack.c.b16 %v494, %v492
    %v627 = vpack.c.b16 %v497, %v495
    %v628 = vpack.c.b16 %v498, %v496
    %v629 = vpack.c.b16 %v501, %v499
    %v630 = vpack.c.b16 %v502, %v500
    %v631 = vpack.c.b16 %v505, %v503
    %v632 = vpack.c.b16 %v506, %v504
    %v633 = vpack.c.b16 %v509, %v507
    %v634 = vpack.c.b16 %v510, %v508
    %v635 = vpack.c.b16 %v513, %v511
    %v636 = vpack.c.b16 %v514, %v512
    %v637 = vpack.c.b16 %v517, %v515
    %v638 = vpack.c.b16 %v518, %v516
    %v639 = vpack.c.b16 %v521, %v519
    %v640 = vpack.c.b16 %v522, %v520
    %v641 = vpack.c.b16 %v525, %v523
    %v642 = vpack.c.b16 %v526, %v524
    %v643 = vpack.c.b16 %v529, %v527
    %v644 = vpack.c.b16 %v530, %v528
    %v645 = vpack.c.b16 %v533, %v531
    %v646 = vpack.c.b16 %v534, %v532
    %759 = vmatpush.bf16.msra.mxu0 %v549
    %760 = vmatpush.bf16.msra.mxu0 %v547
    %761 = vmatpush.bf16.msra.mxu0 %v545
    %762 = vmatpush.bf16.msra.mxu0 %v543
    %763 = vmatpush.bf16.msra.mxu0 %v541
    %764 = vmatpush.bf16.msra.mxu0 %v539
    %765 = vmatpush.bf16.msra.mxu0 %v537
    %766 = vmatpush.bf16.msra.mxu0 %v535
    %767 = vmatmul.bf16.gmra.mxu0 %v185
    %v768 = vpop.f32.mrf.mxu0
    %v769 = vadd.f32 %v159, %v768
    %v770 = vpop.f32.mrf.mxu0
    %v771 = vadd.f32 %v159, %v770
    %772 = vdwg.mxu0
    %773 = vmatpush.bf16.msra.mxu0 %v565
    %774 = vmatpush.bf16.msra.mxu0 %v563
    %775 = vmatpush.bf16.msra.mxu0 %v561
    %776 = vmatpush.bf16.msra.mxu0 %v559
    %777 = vmatpush.bf16.msra.mxu0 %v557
    %778 = vmatpush.bf16.msra.mxu0 %v555
    %779 = vmatpush.bf16.msra.mxu0 %v553
    %780 = vmatpush.bf16.msra.mxu0 %v551
    %781 = vmatmul.bf16.gmra.mxu0 %v186
    %v782 = vpop.f32.mrf.mxu0
    %v783 = vadd.f32 %v769, %v782
    %v784 = vpop.f32.mrf.mxu0
    %v785 = vadd.f32 %v771, %v784
    %786 = vdwg.mxu0
    %787 = vmatpush.bf16.msra.mxu0 %v581
    %788 = vmatpush.bf16.msra.mxu0 %v579
    %789 = vmatpush.bf16.msra.mxu0 %v577
    %790 = vmatpush.bf16.msra.mxu0 %v575
    %791 = vmatpush.bf16.msra.mxu0 %v573
    %792 = vmatpush.bf16.msra.mxu0 %v571
    %793 = vmatpush.bf16.msra.mxu0 %v569
    %794 = vmatpush.bf16.msra.mxu0 %v567
    %795 = vmatmul.bf16.gmra.mxu0 %v187
    %v796 = vpop.f32.mrf.mxu0
    %v797 = vadd.f32 %v783, %v796
    %v798 = vpop.f32.mrf.mxu0
    %v799 = vadd.f32 %v785, %v798
    %800 = vdwg.mxu0
    %801 = vmatpush.bf16.msra.mxu0 %v597
    %802 = vmatpush.bf16.msra.mxu0 %v595
    %803 = vmatpush.bf16.msra.mxu0 %v593
    %804 = vmatpush.bf16.msra.mxu0 %v591
    %805 = vmatpush.bf16.msra.mxu0 %v589
    %806 = vmatpush.bf16.msra.mxu0 %v587
    %807 = vmatpush.bf16.msra.mxu0 %v585
    %808 = vmatpush.bf16.msra.mxu0 %v583
    %809 = vmatmul.bf16.gmra.mxu0 %v188
    %v810 = vpop.f32.mrf.mxu0
    %v811 = vadd.f32 %v797, %v810
    %v812 = vpop.f32.mrf.mxu0
    %v813 = vadd.f32 %v799, %v812
    %814 = vdwg.mxu0
    %815 = vmatpush.bf16.msra.mxu0 %v613
    %816 = vmatpush.bf16.msra.mxu0 %v611
    %817 = vmatpush.bf16.msra.mxu0 %v609
    %818 = vmatpush.bf16.msra.mxu0 %v607
    %819 = vmatpush.bf16.msra.mxu0 %v605
    %820 = vmatpush.bf16.msra.mxu0 %v603
    %821 = vmatpush.bf16.msra.mxu0 %v601
    %822 = vmatpush.bf16.msra.mxu0 %v599
    %823 = vmatmul.bf16.gmra.mxu0 %v189
    %v824 = vpop.f32.mrf.mxu0
    %v825 = vadd.f32 %v811, %v824
    %v826 = vpop.f32.mrf.mxu0
    %v827 = vadd.f32 %v813, %v826
    %828 = vdwg.mxu0
    %829 = vmatpush.bf16.msra.mxu0 %v629
    %830 = vmatpush.bf16.msra.mxu0 %v627
    %831 = vmatpush.bf16.msra.mxu0 %v625
    %832 = vmatpush.bf16.msra.mxu0 %v623
    %833 = vmatpush.bf16.msra.mxu0 %v621
    %834 = vmatpush.bf16.msra.mxu0 %v619
    %835 = vmatpush.bf16.msra.mxu0 %v617
    %836 = vmatpush.bf16.msra.mxu0 %v615
    %837 = vmatmul.bf16.gmra.mxu0 %v190
    %v838 = vpop.f32.mrf.mxu0
    %v839 = vadd.f32 %v825, %v838
    %v840 = vpop.f32.mrf.mxu0
    %v841 = vadd.f32 %v827, %v840
    %842 = vdwg.mxu0
    %843 = vmatpush.bf16.msra.mxu0 %v645
    %844 = vmatpush.bf16.msra.mxu0 %v643
    %845 = vmatpush.bf16.msra.mxu0 %v641
    %846 = vmatpush.bf16.msra.mxu0 %v639
    %847 = vmatpush.bf16.msra.mxu0 %v637
    %848 = vmatpush.bf16.msra.mxu0 %v635
    %849 = vmatpush.bf16.msra.mxu0 %v633
    %850 = vmatpush.bf16.msra.mxu0 %v631
    %851 = vmatmul.bf16.gmra.mxu0 %v191
    %v852 = vpop.f32.mrf.mxu0
    %v853 = vadd.f32 %v839, %v852
    %v854 = vpop.f32.mrf.mxu0
    %v855 = vadd.f32 %v841, %v854
    %856 = vdwg.mxu0
    %857 = vmatpush.bf16.msra.mxu0 %v550
    %858 = vmatpush.bf16.msra.mxu0 %v548
    %859 = vmatpush.bf16.msra.mxu0 %v546
    %860 = vmatpush.bf16.msra.mxu0 %v544
    %861 = vmatpush.bf16.msra.mxu0 %v542
    %862 = vmatpush.bf16.msra.mxu0 %v540
    %863 = vmatpush.bf16.msra.mxu0 %v538
    %864 = vmatpush.bf16.msra.mxu0 %v536
    %865 = vmatmul.bf16.gmra.mxu0 %v185
    %v866 = vpop.f32.mrf.mxu0
    %v867 = vadd.f32 %v160, %v866
    %v868 = vpop.f32.mrf.mxu0
    %v869 = vadd.f32 %v160, %v868
    %870 = vdwg.mxu0
    %871 = vmatpush.bf16.msra.mxu0 %v566
    %872 = vmatpush.bf16.msra.mxu0 %v564
    %873 = vmatpush.bf16.msra.mxu0 %v562
    %874 = vmatpush.bf16.msra.mxu0 %v560
    %875 = vmatpush.bf16.msra.mxu0 %v558
    %876 = vmatpush.bf16.msra.mxu0 %v556
    %877 = vmatpush.bf16.msra.mxu0 %v554
    %878 = vmatpush.bf16.msra.mxu0 %v552
    %879 = vmatmul.bf16.gmra.mxu0 %v186
    %v880 = vpop.f32.mrf.mxu0
    %v881 = vadd.f32 %v867, %v880
    %v882 = vpop.f32.mrf.mxu0
    %v883 = vadd.f32 %v869, %v882
    %884 = vdwg.mxu0
    %885 = vmatpush.bf16.msra.mxu0 %v582
    %886 = vmatpush.bf16.msra.mxu0 %v580
    %887 = vmatpush.bf16.msra.mxu0 %v578
    %888 = vmatpush.bf16.msra.mxu0 %v576
    %889 = vmatpush.bf16.msra.mxu0 %v574
    %890 = vmatpush.bf16.msra.mxu0 %v572
    %891 = vmatpush.bf16.msra.mxu0 %v570
    %892 = vmatpush.bf16.msra.mxu0 %v568
    %893 = vmatmul.bf16.gmra.mxu0 %v187
    %v894 = vpop.f32.mrf.mxu0
    %v895 = vadd.f32 %v881, %v894
    %v896 = vpop.f32.mrf.mxu0
    %v897 = vadd.f32 %v883, %v896
    %898 = vdwg.mxu0
    %899 = vmatpush.bf16.msra.mxu0 %v598
    %900 = vmatpush.bf16.msra.mxu0 %v596
    %901 = vmatpush.bf16.msra.mxu0 %v594
    %902 = vmatpush.bf16.msra.mxu0 %v592
    %903 = vmatpush.bf16.msra.mxu0 %v590
    %904 = vmatpush.bf16.msra.mxu0 %v588
    %905 = vmatpush.bf16.msra.mxu0 %v586
    %906 = vmatpush.bf16.msra.mxu0 %v584
    %907 = vmatmul.bf16.gmra.mxu0 %v188
    %v908 = vpop.f32.mrf.mxu0
    %v909 = vadd.f32 %v895, %v908
    %v910 = vpop.f32.mrf.mxu0
    %v911 = vadd.f32 %v897, %v910
    %912 = vdwg.mxu0
    %913 = vmatpush.bf16.msra.mxu0 %v614
    %914 = vmatpush.bf16.msra.mxu0 %v612
    %915 = vmatpush.bf16.msra.mxu0 %v610
    %916 = vmatpush.bf16.msra.mxu0 %v608
    %917 = vmatpush.bf16.msra.mxu0 %v606
    %918 = vmatpush.bf16.msra.mxu0 %v604
    %919 = vmatpush.bf16.msra.mxu0 %v602
    %920 = vmatpush.bf16.msra.mxu0 %v600
    %921 = vmatmul.bf16.gmra.mxu0 %v189
    %v922 = vpop.f32.mrf.mxu0
    %v923 = vadd.f32 %v909, %v922
    %v924 = vpop.f32.mrf.mxu0
    %v925 = vadd.f32 %v911, %v924
    %926 = vdwg.mxu0
    %927 = vmatpush.bf16.msra.mxu0 %v630
    %928 = vmatpush.bf16.msra.mxu0 %v628
    %929 = vmatpush.bf16.msra.mxu0 %v626
    %930 = vmatpush.bf16.msra.mxu0 %v624
    %931 = vmatpush.bf16.msra.mxu0 %v622
    %932 = vmatpush.bf16.msra.mxu0 %v620
    %933 = vmatpush.bf16.msra.mxu0 %v618
    %934 = vmatpush.bf16.msra.mxu0 %v616
    %935 = vmatmul.bf16.gmra.mxu0 %v190
    %v936 = vpop.f32.mrf.mxu0
    %v937 = vadd.f32 %v923, %v936
    %v938 = vpop.f32.mrf.mxu0
    %v939 = vadd.f32 %v925, %v938
    %940 = vdwg.mxu0
    %941 = vmatpush.bf16.msra.mxu0 %v646
    %942 = vmatpush.bf16.msra.mxu0 %v644
    %943 = vmatpush.bf16.msra.mxu0 %v642
    %944 = vmatpush.bf16.msra.mxu0 %v640
    %945 = vmatpush.bf16.msra.mxu0 %v638
    %946 = vmatpush.bf16.msra.mxu0 %v636
    %947 = vmatpush.bf16.msra.mxu0 %v634
    %948 = vmatpush.bf16.msra.mxu0 %v632
    %949 = vmatmul.bf16.gmra.mxu0 %v191
    %v950 = vpop.f32.mrf.mxu0
    %v951 = vadd.f32 %v937, %v950
    %v952 = vpop.f32.mrf.mxu0
    %v953 = vadd.f32 %v939, %v952
    %954 = vdwg.mxu0
    %v955 = vmax.f32 %v853, 0.0
    %v956 = vmax.f32 %v951, 0.0
    %v957 = vmax.f32 %v855, 0.0
    %v958 = vmax.f32 %v953, 0.0
    %v959 = vpack.c.bf16 %v957, %v955
    %v960 = vpack.c.bf16 %v958, %v956
    %v961 = vld [vmem:[%s3] sm:$0xf]
    %v962 = vld [vmem:[%s3 + $0x4] sm:$0xf]
    %v963 = vld [vmem:[%s3 + $0x8] sm:$0xf]
    %v964 = vld [vmem:[%s3 + $0xc] sm:$0xf]
    %v965 = vld [vmem:[%s3 + $0x10] sm:$0xf]
    %v966 = vld [vmem:[%s3 + $0x14] sm:$0xf]
    %v967 = vld [vmem:[%s3 + $0x18] sm:$0xf]
    %v968 = vld [vmem:[%s3 + $0x1c] sm:$0xf]
    %v969 = vld [vmem:[%s3 + $0x20] sm:$0xf]
    %v970 = vld [vmem:[%s3 + $0x24] sm:$0xf]
    %v971 = vld [vmem:[%s3 + $0x28] sm:$0xf]
    %v972 = vld [vmem:[%s3 + $0x2c] sm:$0xf]
    %v973 = vld [vmem:[%s3 + $0x30] sm:$0xf]
    %v974 = vld [vmem:[%s3 + $0x34] sm:$0xf]
    %v975 = vld [vmem:[%s3 + $0x38] sm:$0xf]
    %v976 = vld [vmem:[%s3 + $0x3c] sm:$0xf]
    %v977 = vld [vmem:[%s3 + $0x40] sm:$0xf]
    %v978 = vld [vmem:[%s3 + $0x44] sm:$0xf]
    %v979 = vld [vmem:[%s3 + $0x48] sm:$0xf]
    %v980 = vld [vmem:[%s3 + $0x4c] sm:$0xf]
    %v981 = vld [vmem:[%s3 + $0x50] sm:$0xf]
    %v982 = vld [vmem:[%s3 + $0x54] sm:$0xf]
    %v983 = vld [vmem:[%s3 + $0x58] sm:$0xf]
    %v984 = vld [vmem:[%s3 + $0x5c] sm:$0xf]
    %v985 = vld [vmem:[%s3 + $0x60] sm:$0xf]
    %v986 = vld [vmem:[%s3 + $0x64] sm:$0xf]
    %v987 = vld [vmem:[%s3 + $0x68] sm:$0xf]
    %v988 = vld [vmem:[%s3 + $0x6c] sm:$0xf]
    %v989 = vld [vmem:[%s3 + $0x70] sm:$0xf]
    %v990 = vld [vmem:[%s3 + $0x74] sm:$0xf]
    %v991 = vld [vmem:[%s3 + $0x78] sm:$0xf]
    %v992 = vld [vmem:[%s3 + $0x7c] sm:$0xf]
    %v993 = vld [vmem:[%s4] sm:$0x1]
    %v995 = vperm.slane %v993, 0
    %v1029 = vunpack.c.l.b16 %v961
    %v1030 = vunpack.c.l.b16 %v962
    %v1031 = vunpack.c.l.b16 %v963
    %v1032 = vunpack.c.l.b16 %v964
    %v1033 = vunpack.c.l.b16 %v965
    %v1034 = vunpack.c.l.b16 %v966
    %v1035 = vunpack.c.l.b16 %v967
    %v1036 = vunpack.c.l.b16 %v968
    %v1037 = vunpack.c.l.b16 %v969
    %v1038 = vunpack.c.l.b16 %v970
    %v1039 = vunpack.c.l.b16 %v971
    %v1040 = vunpack.c.l.b16 %v972
    %v1041 = vunpack.c.l.b16 %v973
    %v1042 = vunpack.c.l.b16 %v974
    %v1043 = vunpack.c.l.b16 %v975
    %v1044 = vunpack.c.l.b16 %v976
    %v1045 = vunpack.c.l.b16 %v977
    %v1046 = vunpack.c.l.b16 %v978
    %v1047 = vunpack.c.l.b16 %v979
    %v1048 = vunpack.c.l.b16 %v980
    %v1049 = vunpack.c.l.b16 %v981
    %v1050 = vunpack.c.l.b16 %v982
    %v1051 = vunpack.c.l.b16 %v983
    %v1052 = vunpack.c.l.b16 %v984
    %v1053 = vunpack.c.l.b16 %v985
    %v1054 = vunpack.c.l.b16 %v986
    %v1055 = vunpack.c.l.b16 %v987
    %v1056 = vunpack.c.l.b16 %v988
    %v1057 = vunpack.c.l.b16 %v989
    %v1058 = vunpack.c.l.b16 %v990
    %v1059 = vunpack.c.l.b16 %v991
    %v1060 = vunpack.c.l.b16 %v992
    %v1061 = vpack.c.b16 %v1030, %v1029
    %v1062 = vpack.c.b16 %v1032, %v1031
    %v1063 = vpack.c.b16 %v1034, %v1033
    %v1064 = vpack.c.b16 %v1036, %v1035
    %v1065 = vpack.c.b16 %v1038, %v1037
    %v1066 = vpack.c.b16 %v1040, %v1039
    %v1067 = vpack.c.b16 %v1042, %v1041
    %v1068 = vpack.c.b16 %v1044, %v1043
    %v1069 = vpack.c.b16 %v1046, %v1045
    %v1070 = vpack.c.b16 %v1048, %v1047
    %v1071 = vpack.c.b16 %v1050, %v1049
    %v1072 = vpack.c.b16 %v1052, %v1051
    %v1073 = vpack.c.b16 %v1054, %v1053
    %v1074 = vpack.c.b16 %v1056, %v1055
    %v1075 = vpack.c.b16 %v1058, %v1057
    %v1076 = vpack.c.b16 %v1060, %v1059
    %1093 = vmatpush.bf16.msra.mxu0 %v1068
    %1094 = vmatpush.bf16.msra.mxu0 %v1067
    %1095 = vmatpush.bf16.msra.mxu0 %v1066
    %1096 = vmatpush.bf16.msra.mxu0 %v1065
    %1097 = vmatpush.bf16.msra.mxu0 %v1064
    %1098 = vmatpush.bf16.msra.mxu0 %v1063
    %1099 = vmatpush.bf16.msra.mxu0 %v1062
    %1100 = vmatpush.bf16.msra.mxu0 %v1061
    %1101 = vmatmul.bf16.gmra.mxu0 %v959
    %v1102 = vpop.f32.mrf.mxu0
    %v1103 = vadd.f32 %v995, %v1102
    %v1104 = vpop.f32.mrf.mxu0
    %v1105 = vadd.f32 %v995, %v1104
    %1106 = vdwg.mxu0
    %1107 = vmatpush.bf16.msra.mxu0 %v1076
    %1108 = vmatpush.bf16.msra.mxu0 %v1075
    %1109 = vmatpush.bf16.msra.mxu0 %v1074
    %1110 = vmatpush.bf16.msra.mxu0 %v1073
    %1111 = vmatpush.bf16.msra.mxu0 %v1072
    %1112 = vmatpush.bf16.msra.mxu0 %v1071
    %1113 = vmatpush.bf16.msra.mxu0 %v1070
    %1114 = vmatpush.bf16.msra.mxu0 %v1069
    %1115 = vmatmul.bf16.gmra.mxu0 %v960
    %v1116 = vpop.f32.mrf.mxu0
    %v1117 = vadd.f32 %v1103, %v1116
    %v1118 = vpop.f32.mrf.mxu0
    %v1119 = vadd.f32 %v1105, %v1118
    %1120 = vdwg.mxu0
    %vm1121 = vcmask 80896
    %v1122 = vsel %vm1121, %v1117, -inf
    %1123 = vmax.xlane.f32.xlu0 %v1122
    %v1124 = vpop.xlane.xlu0 %1123
    %v1125 = vsel %vm1121, %v1119, -inf
    %1126 = vmax.xlane.f32.xlu0 %v1125
    %v1127 = vpop.xlane.xlu0 %1126
    %v1128 = vsub.f32 %v1117, %v1124
    %v1129 = vsub.f32 %v1119, %v1127
    %v1130 = vmul.f32 %v1128, 1.442695
    %v1131 = vpow.pop %v1130
    %v1132 = vmul.f32 %v1129, 1.442695
    %v1133 = vpow.pop %v1132
    %v1134 = vsel %vm1121, %v1131, 0.0
    %1135 = vadd.xlane.f32.xlu0 %v1134
    %v1136 = vpop.xlane.xlu0 %1135
    %v1137 = vsel %vm1121, %v1133, 0.0
    %1138 = vadd.xlane.f32.xlu0 %v1137
    %v1139 = vpop.xlane.xlu0 %1138
    %v1140 = vrcp.pop %v1136
    %v1141 = vmul.f32 %v1136, %v1140
    %v1142 = vsub.f32 1.0, %v1141
    %v1143 = vmul.f32 %v1140, %v1142
    %v1144 = vadd.f32 %v1140, %v1143
    %vm1145 = vweird.f32 %v1136
    %vm1146 = vweird.f32 %v1140
    %vm1147 = vmor %vm1145, %vm1146
    %v1148 = vsel %vm1147, %v1140, %v1144
    %v1149 = vand.u32 2147483647, %v1136
    %vm1150 = vcmp.eq.f32.partialorder %v1149, 8.507059e+37
    %v1151 = vand.u32 %v1136, 2147483648
    %v1152 = vor.u32 1.1754944e-38, %v1151
    %v1153 = vsel %vm1150, %v1152, %v1148
    %v1154 = vrcp.pop %v1139
    %v1155 = vmul.f32 %v1139, %v1154
    %v1156 = vsub.f32 1.0, %v1155
    %v1157 = vmul.f32 %v1154, %v1156
    %v1158 = vadd.f32 %v1154, %v1157
    %vm1159 = vweird.f32 %v1139
    %vm1160 = vweird.f32 %v1154
    %vm1161 = vmor %vm1159, %vm1160
    %v1162 = vsel %vm1161, %v1154, %v1158
    %v1163 = vand.u32 2147483647, %v1139
    %vm1164 = vcmp.eq.f32.partialorder %v1163, 8.507059e+37
    %v1165 = vand.u32 %v1139, 2147483648
    %v1166 = vor.u32 1.1754944e-38, %v1165
    %v1167 = vsel %vm1164, %v1166, %v1162
    %v1168 = vmul.f32 %v1131, %v1153
    %v1169 = vmul.f32 %v1133, %v1167
    %1170 = vst.msk [vmem:[#allocation5] sm:$0xff] %vm1121, %v1168
    %1171 = vst.msk [vmem:[#allocation5 + $0x8] sm:$0xff] %vm1121, %v1169
    // Predicated region
    $region26: #{tpu_custom_call.1} parent=1 // pred_check
      _
    $region27: #{tpu_custom_call.1} parent=1 // pred_check_branch
      %1173 = sbr.rel (0) target = $region29
    $region28: #{tpu_custom_call.1} parent=1 // pred_region
      %1175 = vsyncadd [#allocation4], 0
      %s1176 = sshll.u32 [#allocation5], 4
      %s1177 = int_to_ptr.vmem [resolvable:$true] %s1176
      %s1178 = sshll.u32 %s5, 4
      %s1179 = int_to_ptr.hbm [resolvable:$true] %s1178
      %1184 = dma.vmem_to_hbm [thread:$0]  %s1177, 256, %s1179, [#allocation4], 128, 128, 8
    $region29: #{tpu_custom_call.1} parent=1 // pred_fallthru
      _
    // Predicated region
    $region30: #{tpu_custom_call.1} parent=1 // pred_check
      _
    $region31: #{tpu_custom_call.1} parent=1 // pred_check_branch
      %1186 = sbr.rel (0) target = $region33
    $region32: #{tpu_custom_call.1} parent=1 // pred_region
      %1188 = dma.done [#allocation4], 256
    $region33: #{tpu_custom_call.1} parent=1 // pred_fallthru
      _
    %1189 = vsyncpa [#allocation3], 1
    %1190 = vsyncpa [#allocation4], 1

</llo_original>
